<compile_context>
chip_gen: v7x
topology: tpu7x:2x2x1
jax: 0.10.0
libtpu: 0.0.40
codegen_flags: <defaults>
</compile_context>

<pallas_src>
import jax
import jax.numpy as jnp
from jax.experimental import pallas as pl
from jax.experimental.pallas import tpu as pltpu


_TARGET_BLOCK_ELEMS = 131072  # spatial elements per channel per grid step
_SUBLANE_CHUNK = 32           # rows per in-kernel chunk (matches int8 (32,128) packing)
_VMEM_LIMIT_BYTES = 48 * 1024 * 1024


def _choose_tiling(hw: int):
    """Pick (lane width L, rows R, rows-per-step TR) with HW = R * L."""
    if hw % 128 != 0:
        # TODO(synk): pad spatial dims in the wrapper for non-128-multiple H*W.
        raise ValueError(f"H*W={hw} must be a multiple of 128")
    # Lane capped at 512: still lane-dense unmasked stores, but keeps the
    # 32-sublane f32 working set at ~16 vregs per operand (no spills).
    lane = next(c for c in (512, 256, 128) if hw % c == 0)
    rows = hw // lane
    target = max(1, _TARGET_BLOCK_ELEMS // lane)
    cap = min(rows, target)
    tr = None
    # Prefer a step row-count that is a multiple of 32 (int8 packed-tile
    # aligned), then a multiple of 8 (f32 aligned), else the full extent.
    for align in (32, 8):
        for d in range(cap, 0, -1):
            if rows % d == 0 and d % align == 0:
                tr = d
                break
        if tr is not None:
            break
    if tr is None:
        tr = rows  # full extent is always a legal block dim
    return lane, rows, tr


def _sodium_fused_kernel(ws1_ref, wmask_ref, bias_ref, s1_ref, mask_ref, o_ref):
    """One grid step = (batch b, spatial tile t).

    ws1_ref:  SMEM (6,)   f32  per-channel weights for the s1 channels
    wmask_ref:SMEM (12,)  f32  folded (mask_conv o head) weights for raw mask channels
    bias_ref: SMEM (B,)   f32  per-batch bias (conv bias + timestamp map + head bias)
    s1_ref:   VMEM (1, 6, TR, L)   s1 channels (native dtype, cast in kernel)
    mask_ref: VMEM (1, 12, TR, L)  raw mask channels (int8/bool-like, cast in kernel)
    o_ref:    VMEM (1, 1, TR, L)   output LAI tile (f32)
    """
    b = pl.program_id(0)

    _, n_s1, tr, lanes = s1_ref.shape
    n_mask = mask_ref.shape[1]

    # Hoist all SMEM scalar reads and the bias splat out of the chunk loop
    # (JAX does not CSE broadcast_in_dim / repeated scalar loads).
    w_s1 = [ws1_ref[c] for c in range(n_s1)]
    w_mask = [wmask_ref[c] for c in range(n_mask)]
    bias = bias_ref[b]
    chunk = min(_SUBLANE_CHUNK, tr)
    bias_splat = jnp.full((chunk, lanes), bias, dtype=jnp.float32)

    # Static chunk loop over sublane groups keeps the register working set small
    # while the DMA block stays large (overhead amortization).
    r0 = 0
    while r0 < tr:
        rows = min(chunk, tr - r0)
        acc = bias_splat if rows == chunk else bias_splat[:rows]
        for c in range(n_s1):                       # unrolled VPU FMA chain
            acc = acc + w_s1[c] * s1_ref[0, c, r0:r0 + rows, :].astype(jnp.float32)
        for c in range(n_mask):
            acc = acc + w_mask[c] * mask_ref[0, c, r0:r0 + rows, :].astype(jnp.float32)
        o_ref[0, 0, r0:r0 + rows, :] = acc          # full-lane-width unmasked store
        r0 += rows


def sodium_forward(s1_data, in_lai, in_mask_lai, glob, params):
    """Sodium forward pass.

    s1_data:     (B, 3, 2, H, W)
    in_lai:      (B, 2, 1, H, W)   -- unused by Sodium (kept for the Atom contract)
    in_mask_lai: (B, 2, 6, H, W)   -- best supplied as int8/bool (0/1) to minimize HBM bytes
    glob:        (B, 2)
    returns (lai, None) with lai of shape (B, 1, H, W)
    """
    del in_lai  # Sodium.forward does not use in_lai
    B = s1_data.shape[0]
    H, W = s1_data.shape[-2:]
    hw = H * W
    assert s1_data.shape[1] * s1_data.shape[2] == 6
    assert in_mask_lai.shape[1] == 2 and in_mask_lai.shape[2] == 6

    # ---- small parameter algebra (wrapper side, negligible cost) ----
    conv_w = params["mask_conv_w"].astype(jnp.float32)        # (E, 6)
    conv_b = params["mask_conv_b"].astype(jnp.float32)        # (E,)
    E = conv_w.shape[0]
    w1 = params["mlp_w1"].astype(jnp.float32)                 # (h, 2)
    b1 = params["mlp_b1"].astype(jnp.float32)
    w2 = params["mlp_w2"].astype(jnp.float32)                 # (emb, h)
    b2 = params["mlp_b2"].astype(jnp.float32)
    emb = w2.shape[0]
    head_w = params["head_w"].astype(jnp.float32)             # (6 + 2E + emb*emb,)
    head_b = jnp.asarray(params["head_b"], jnp.float32)

    # Split the synthetic head over the concat channel groups
    # concat order: [s1 (6), mask_t1 (E), mask_t2 (E), timestamp_map (emb*emb)]
    w_s1 = head_w[:6]
    w_m1 = head_w[6:6 + E]
    w_m2 = head_w[6 + E:6 + 2 * E]
    w_ts = head_w[6 + 2 * E:]

    # Fold the 1x1 mask_conv into the head:  head_m @ (convW @ m + convB)
    #   = (head_m @ convW) @ m + head_m @ convB
    # raw mask layout after reshape is channels [t=0 (6), t=1 (6)];
    # mask_t2 = conv(in_mask_lai[:,0]), mask_t1 = conv(in_mask_lai[:,1]).
    w_mask = jnp.concatenate([w_m2 @ conv_w, w_m1 @ conv_w])  # (12,)

    # Tiny MLP + timestamp broadcast folded into a per-batch scalar bias.
    hid = jax.nn.relu(glob.astype(jnp.float32) @ w1.T + b1)
    ts = hid @ w2.T + b2                                      # (B, emb)
    # timestamp_map[b, k, :, :] == ts[b, k % emb]  (PyTorch .repeat semantics)
    w_ts_red = w_ts.reshape(emb, emb).sum(axis=0)             # (emb,)
    bias = ts @ w_ts_red + (w_m1 + w_m2) @ conv_b + head_b    # (B,)

    # ---- layout: flatten spatial to (R, L) with L a multiple of 128 ----
    lane, rows, tr = _choose_tiling(hw)
    x_s1 = s1_data.reshape(B, 6, rows, lane)                  # contiguous view, no cast
    x_mask = in_mask_lai.reshape(B, 12, rows, lane)           # keep narrow dtype in HBM

    grid = (B, rows // tr)
    out = pl.pallas_call(
        _sodium_fused_kernel,
        out_shape=jax.ShapeDtypeStruct((B, 1, rows, lane), jnp.float32),
        grid=grid,
        in_specs=[
            pl.BlockSpec(memory_space=pltpu.MemorySpace.SMEM),            # w_s1 (6,)
            pl.BlockSpec(memory_space=pltpu.MemorySpace.SMEM),            # w_mask (12,)
            pl.BlockSpec(memory_space=pltpu.MemorySpace.SMEM),            # bias (B,)
            pl.BlockSpec((1, 6, tr, lane), lambda b, t: (b, 0, t, 0)),    # s1 tile
            pl.BlockSpec((1, 12, tr, lane), lambda b, t: (b, 0, t, 0)),   # mask tile
        ],
        out_specs=pl.BlockSpec((1, 1, tr, lane), lambda b, t: (b, 0, t, 0)),
        compiler_params=pltpu.CompilerParams(
            dimension_semantics=("parallel", "parallel"),
            vmem_limit_bytes=_VMEM_LIMIT_BYTES),
    )(w_s1, w_mask, bias, x_s1, x_mask)

    lai = out.reshape(B, 1, H, W)
    return lai, None


def _reference_forward(s1_data, in_lai, in_mask_lai, glob, params):
    """Pure-JAX unfused reference (explicit conv / MLP / repeat / concat / head)."""
    del in_lai
    B = s1_data.shape[0]
    H, W = s1_data.shape[-2:]
    s1_concat = s1_data.reshape(B, 6, H, W).astype(jnp.float32)

    conv_w = params["mask_conv_w"].astype(jnp.float32)
    conv_b = params["mask_conv_b"].astype(jnp.float32)

    def mask_conv(x):                                         # 1x1 conv, x: (B, 6, H, W)
        return (jnp.einsum("ec,bchw->behw", conv_w, x.astype(jnp.float32))
                + conv_b[None, :, None, None])

    mask_t2 = mask_conv(in_mask_lai[:, 0])
    mask_t1 = mask_conv(in_mask_lai[:, 1])

    hid = jax.nn.relu(glob.astype(jnp.float32) @ params["mlp_w1"].T + params["mlp_b1"])
    ts = hid @ params["mlp_w2"].T + params["mlp_b2"]          # (B, emb)
    emb = ts.shape[1]
    ts_map = jnp.tile(ts[:, :, None, None], (1, emb, H, W))   # (B, emb*emb, H, W)

    concat_all = jnp.concatenate([s1_concat, mask_t1, mask_t2, ts_map], axis=1)
    # TODO(synk): stand-in 1x1 head instead of the (unspecified) AutoEncoder.
    out = jnp.einsum("k,bkhw->bhw", params["head_w"].astype(jnp.float32), concat_all)
    return (out + jnp.asarray(params["head_b"], jnp.float32))[:, None]


if __name__ == "__main__":
    # Small shapes consistent with Sodium (spatial 256 -> 16, glob features = 2,
    # 6 mask channels required by Conv2d(6, E)).
    B, H, W = 2, 16, 16
    E = 8                     # mask_embedding_channels
    mlp_layers = (16, 8)      # -> timestamp embedding dim 8
    emb = mlp_layers[1]
    n_glob = 2

    key = jax.random.PRNGKey(0)
    ks = jax.random.split(key, 12)

    s1_data = jax.random.normal(ks[0], (B, 3, 2, H, W), jnp.float32)
    in_lai = jax.random.normal(ks[1], (B, 2, 1, H, W), jnp.float32)     # unused by Sodium
    # Mask streamed as int8 (0/1 exact): 1 B/px/channel in HBM, cast to f32 in-kernel.
    in_mask_lai = (jax.random.uniform(ks[2], (B, 2, 6, H, W)) > 0.5).astype(jnp.int8)
    glob = jax.random.normal(ks[3], (B, n_glob), jnp.float32)

    n_head_in = 6 + 2 * E + emb * emb
    params = {
        "mask_conv_w": jax.random.normal(ks[4], (E, 6), jnp.float32) * 0.2,
        "mask_conv_b": jax.random.normal(ks[5], (E,), jnp.float32) * 0.1,
        "mlp_w1": jax.random.normal(ks[6], (mlp_layers[0], n_glob), jnp.float32) * 0.3,
        "mlp_b1": jax.random.normal(ks[7], (mlp_layers[0],), jnp.float32) * 0.1,
        "mlp_w2": jax.random.normal(ks[8], (emb, mlp_layers[0]), jnp.float32) * 0.3,
        "mlp_b2": jax.random.normal(ks[9], (emb,), jnp.float32) * 0.1,
        "head_w": jax.random.normal(ks[10], (n_head_in,), jnp.float32) * 0.1,
        "head_b": jnp.asarray(0.05, jnp.float32),
    }

    lai, other = sodium_forward(s1_data, in_lai, in_mask_lai, glob, params)
    lai = jax.block_until_ready(lai)

    ref = _reference_forward(s1_data, in_lai, in_mask_lai, glob, params)
    assert lai.shape == (B, 1, H, W), lai.shape
    err = float(jnp.max(jnp.abs(lai - ref)))
    assert err < 5e-4, err

    print("KERNEL_OK")
</pallas_src>

<mosaic_0001>
module attributes {stable_mosaic.version = 11 : i64} {
  func.func @_sodium_fused_kernel(%arg0: i32, %arg1: i32, %arg2: memref<6xf32, #tpu.memory_space<smem>>, %arg3: memref<12xf32, #tpu.memory_space<smem>>, %arg4: memref<2xf32, #tpu.memory_space<smem>>, %arg5: memref<1x6x1x256xf32, #tpu.memory_space<vmem>>, %arg6: memref<1x12x1x256xi8, #tpu.memory_space<vmem>>, %arg7: memref<1x1x1x256xf32, #tpu.memory_space<vmem>>) attributes {dimension_semantics = [#tpu.dimension_semantics<parallel>, #tpu.dimension_semantics<parallel>], iteration_bounds = array<i64: 2, 1>, scalar_prefetch = 0 : i64, scratch_operands = 0 : i64, tpu.core_type = #tpu.core_type<tc>, window_params = [{transform_indices = @transform_0, window_bounds = array<i64: 6>}, {transform_indices = @transform_1, window_bounds = array<i64: 12>}, {transform_indices = @transform_2, window_bounds = array<i64: 2>}, {transform_indices = @transform_3, window_bounds = array<i64: 1, 6, 1, 256>}, {transform_indices = @transform_4, window_bounds = array<i64: 1, 12, 1, 256>}, {transform_indices = @transform_5, window_bounds = array<i64: 1, 1, 1, 256>}]} {
    %c0 = arith.constant 0 : index
    %0 = memref.load %arg2[%c0] : memref<6xf32, #tpu.memory_space<smem>>
    %c1 = arith.constant 1 : index
    %1 = memref.load %arg2[%c1] : memref<6xf32, #tpu.memory_space<smem>>
    %c2 = arith.constant 2 : index
    %2 = memref.load %arg2[%c2] : memref<6xf32, #tpu.memory_space<smem>>
    %c3 = arith.constant 3 : index
    %3 = memref.load %arg2[%c3] : memref<6xf32, #tpu.memory_space<smem>>
    %c4 = arith.constant 4 : index
    %4 = memref.load %arg2[%c4] : memref<6xf32, #tpu.memory_space<smem>>
    %c5 = arith.constant 5 : index
    %5 = memref.load %arg2[%c5] : memref<6xf32, #tpu.memory_space<smem>>
    %c0_0 = arith.constant 0 : index
    %6 = memref.load %arg3[%c0_0] : memref<12xf32, #tpu.memory_space<smem>>
    %c1_1 = arith.constant 1 : index
    %7 = memref.load %arg3[%c1_1] : memref<12xf32, #tpu.memory_space<smem>>
    %c2_2 = arith.constant 2 : index
    %8 = memref.load %arg3[%c2_2] : memref<12xf32, #tpu.memory_space<smem>>
    %c3_3 = arith.constant 3 : index
    %9 = memref.load %arg3[%c3_3] : memref<12xf32, #tpu.memory_space<smem>>
    %c4_4 = arith.constant 4 : index
    %10 = memref.load %arg3[%c4_4] : memref<12xf32, #tpu.memory_space<smem>>
    %c5_5 = arith.constant 5 : index
    %11 = memref.load %arg3[%c5_5] : memref<12xf32, #tpu.memory_space<smem>>
    %c6 = arith.constant 6 : index
    %12 = memref.load %arg3[%c6] : memref<12xf32, #tpu.memory_space<smem>>
    %c7 = arith.constant 7 : index
    %13 = memref.load %arg3[%c7] : memref<12xf32, #tpu.memory_space<smem>>
    %c8 = arith.constant 8 : index
    %14 = memref.load %arg3[%c8] : memref<12xf32, #tpu.memory_space<smem>>
    %c9 = arith.constant 9 : index
    %15 = memref.load %arg3[%c9] : memref<12xf32, #tpu.memory_space<smem>>
    %c10 = arith.constant 10 : index
    %16 = memref.load %arg3[%c10] : memref<12xf32, #tpu.memory_space<smem>>
    %c11 = arith.constant 11 : index
    %17 = memref.load %arg3[%c11] : memref<12xf32, #tpu.memory_space<smem>>
    %18 = arith.index_cast %arg0 : i32 to index
    %19 = memref.load %arg4[%18] : memref<2xf32, #tpu.memory_space<smem>>
    %20 = vector.broadcast %19 : f32 to vector<1x256xf32>
    %c0_6 = arith.constant 0 : index
    %c0_7 = arith.constant 0 : index
    %c0_8 = arith.constant 0 : index
    %c0_9 = arith.constant 0 : index
    %21 = vector.load %arg5[%c0_6, %c0_7, %c0_8, %c0_9] : memref<1x6x1x256xf32, #tpu.memory_space<vmem>>, vector<1x1x1x256xf32>
    %22 = vector.shape_cast %21 : vector<1x1x1x256xf32> to vector<1x256xf32>
    %23 = vector.broadcast %0 : f32 to vector<1x256xf32>
    %24 = arith.mulf %23, %22 : vector<1x256xf32>
    %25 = arith.addf %20, %24 : vector<1x256xf32>
    %c0_10 = arith.constant 0 : index
    %c1_11 = arith.constant 1 : index
    %c0_12 = arith.constant 0 : index
    %c0_13 = arith.constant 0 : index
    %26 = vector.load %arg5[%c0_10, %c1_11, %c0_12, %c0_13] : memref<1x6x1x256xf32, #tpu.memory_space<vmem>>, vector<1x1x1x256xf32>
    %27 = vector.shape_cast %26 : vector<1x1x1x256xf32> to vector<1x256xf32>
    %28 = vector.broadcast %1 : f32 to vector<1x256xf32>
    %29 = arith.mulf %28, %27 : vector<1x256xf32>
    %30 = arith.addf %25, %29 : vector<1x256xf32>
    %c0_14 = arith.constant 0 : index
    %c2_15 = arith.constant 2 : index
    %c0_16 = arith.constant 0 : index
    %c0_17 = arith.constant 0 : index
    %31 = vector.load %arg5[%c0_14, %c2_15, %c0_16, %c0_17] : memref<1x6x1x256xf32, #tpu.memory_space<vmem>>, vector<1x1x1x256xf32>
    %32 = vector.shape_cast %31 : vector<1x1x1x256xf32> to vector<1x256xf32>
    %33 = vector.broadcast %2 : f32 to vector<1x256xf32>
    %34 = arith.mulf %33, %32 : vector<1x256xf32>
    %35 = arith.addf %30, %34 : vector<1x256xf32>
    %c0_18 = arith.constant 0 : index
    %c3_19 = arith.constant 3 : index
    %c0_20 = arith.constant 0 : index
    %c0_21 = arith.constant 0 : index
    %36 = vector.load %arg5[%c0_18, %c3_19, %c0_20, %c0_21] : memref<1x6x1x256xf32, #tpu.memory_space<vmem>>, vector<1x1x1x256xf32>
    %37 = vector.shape_cast %36 : vector<1x1x1x256xf32> to vector<1x256xf32>
    %38 = vector.broadcast %3 : f32 to vector<1x256xf32>
    %39 = arith.mulf %38, %37 : vector<1x256xf32>
    %40 = arith.addf %35, %39 : vector<1x256xf32>
    %c0_22 = arith.constant 0 : index
    %c4_23 = arith.constant 4 : index
    %c0_24 = arith.constant 0 : index
    %c0_25 = arith.constant 0 : index
    %41 = vector.load %arg5[%c0_22, %c4_23, %c0_24, %c0_25] : memref<1x6x1x256xf32, #tpu.memory_space<vmem>>, vector<1x1x1x256xf32>
    %42 = vector.shape_cast %41 : vector<1x1x1x256xf32> to vector<1x256xf32>
    %43 = vector.broadcast %4 : f32 to vector<1x256xf32>
    %44 = arith.mulf %43, %42 : vector<1x256xf32>
    %45 = arith.addf %40, %44 : vector<1x256xf32>
    %c0_26 = arith.constant 0 : index
    %c5_27 = arith.constant 5 : index
    %c0_28 = arith.constant 0 : index
    %c0_29 = arith.constant 0 : index
    %46 = vector.load %arg5[%c0_26, %c5_27, %c0_28, %c0_29] : memref<1x6x1x256xf32, #tpu.memory_space<vmem>>, vector<1x1x1x256xf32>
    %47 = vector.shape_cast %46 : vector<1x1x1x256xf32> to vector<1x256xf32>
    %48 = vector.broadcast %5 : f32 to vector<1x256xf32>
    %49 = arith.mulf %48, %47 : vector<1x256xf32>
    %50 = arith.addf %45, %49 : vector<1x256xf32>
    %c0_30 = arith.constant 0 : index
    %c0_31 = arith.constant 0 : index
    %c0_32 = arith.constant 0 : index
    %c0_33 = arith.constant 0 : index
    %51 = vector.load %arg6[%c0_30, %c0_31, %c0_32, %c0_33] : memref<1x12x1x256xi8, #tpu.memory_space<vmem>>, vector<1x1x1x256xi8>
    %52 = vector.shape_cast %51 : vector<1x1x1x256xi8> to vector<1x256xi8>
    %53 = arith.sitofp %52 : vector<1x256xi8> to vector<1x256xf32>
    %54 = vector.broadcast %6 : f32 to vector<1x256xf32>
    %55 = arith.mulf %54, %53 : vector<1x256xf32>
    %56 = arith.addf %50, %55 : vector<1x256xf32>
    %c0_34 = arith.constant 0 : index
    %c1_35 = arith.constant 1 : index
    %c0_36 = arith.constant 0 : index
    %c0_37 = arith.constant 0 : index
    %57 = vector.load %arg6[%c0_34, %c1_35, %c0_36, %c0_37] : memref<1x12x1x256xi8, #tpu.memory_space<vmem>>, vector<1x1x1x256xi8>
    %58 = vector.shape_cast %57 : vector<1x1x1x256xi8> to vector<1x256xi8>
    %59 = arith.sitofp %58 : vector<1x256xi8> to vector<1x256xf32>
    %60 = vector.broadcast %7 : f32 to vector<1x256xf32>
    %61 = arith.mulf %60, %59 : vector<1x256xf32>
    %62 = arith.addf %56, %61 : vector<1x256xf32>
    %c0_38 = arith.constant 0 : index
    %c2_39 = arith.constant 2 : index
    %c0_40 = arith.constant 0 : index
    %c0_41 = arith.constant 0 : index
    %63 = vector.load %arg6[%c0_38, %c2_39, %c0_40, %c0_41] : memref<1x12x1x256xi8, #tpu.memory_space<vmem>>, vector<1x1x1x256xi8>
    %64 = vector.shape_cast %63 : vector<1x1x1x256xi8> to vector<1x256xi8>
    %65 = arith.sitofp %64 : vector<1x256xi8> to vector<1x256xf32>
    %66 = vector.broadcast %8 : f32 to vector<1x256xf32>
    %67 = arith.mulf %66, %65 : vector<1x256xf32>
    %68 = arith.addf %62, %67 : vector<1x256xf32>
    %c0_42 = arith.constant 0 : index
    %c3_43 = arith.constant 3 : index
    %c0_44 = arith.constant 0 : index
    %c0_45 = arith.constant 0 : index
    %69 = vector.load %arg6[%c0_42, %c3_43, %c0_44, %c0_45] : memref<1x12x1x256xi8, #tpu.memory_space<vmem>>, vector<1x1x1x256xi8>
    %70 = vector.shape_cast %69 : vector<1x1x1x256xi8> to vector<1x256xi8>
    %71 = arith.sitofp %70 : vector<1x256xi8> to vector<1x256xf32>
    %72 = vector.broadcast %9 : f32 to vector<1x256xf32>
    %73 = arith.mulf %72, %71 : vector<1x256xf32>
    %74 = arith.addf %68, %73 : vector<1x256xf32>
    %c0_46 = arith.constant 0 : index
    %c4_47 = arith.constant 4 : index
    %c0_48 = arith.constant 0 : index
    %c0_49 = arith.constant 0 : index
    %75 = vector.load %arg6[%c0_46, %c4_47, %c0_48, %c0_49] : memref<1x12x1x256xi8, #tpu.memory_space<vmem>>, vector<1x1x1x256xi8>
    %76 = vector.shape_cast %75 : vector<1x1x1x256xi8> to vector<1x256xi8>
    %77 = arith.sitofp %76 : vector<1x256xi8> to vector<1x256xf32>
    %78 = vector.broadcast %10 : f32 to vector<1x256xf32>
    %79 = arith.mulf %78, %77 : vector<1x256xf32>
    %80 = arith.addf %74, %79 : vector<1x256xf32>
    %c0_50 = arith.constant 0 : index
    %c5_51 = arith.constant 5 : index
    %c0_52 = arith.constant 0 : index
    %c0_53 = arith.constant 0 : index
    %81 = vector.load %arg6[%c0_50, %c5_51, %c0_52, %c0_53] : memref<1x12x1x256xi8, #tpu.memory_space<vmem>>, vector<1x1x1x256xi8>
    %82 = vector.shape_cast %81 : vector<1x1x1x256xi8> to vector<1x256xi8>
    %83 = arith.sitofp %82 : vector<1x256xi8> to vector<1x256xf32>
    %84 = vector.broadcast %11 : f32 to vector<1x256xf32>
    %85 = arith.mulf %84, %83 : vector<1x256xf32>
    %86 = arith.addf %80, %85 : vector<1x256xf32>
    %c0_54 = arith.constant 0 : index
    %c6_55 = arith.constant 6 : index
    %c0_56 = arith.constant 0 : index
    %c0_57 = arith.constant 0 : index
    %87 = vector.load %arg6[%c0_54, %c6_55, %c0_56, %c0_57] : memref<1x12x1x256xi8, #tpu.memory_space<vmem>>, vector<1x1x1x256xi8>
    %88 = vector.shape_cast %87 : vector<1x1x1x256xi8> to vector<1x256xi8>
    %89 = arith.sitofp %88 : vector<1x256xi8> to vector<1x256xf32>
    %90 = vector.broadcast %12 : f32 to vector<1x256xf32>
    %91 = arith.mulf %90, %89 : vector<1x256xf32>
    %92 = arith.addf %86, %91 : vector<1x256xf32>
    %c0_58 = arith.constant 0 : index
    %c7_59 = arith.constant 7 : index
    %c0_60 = arith.constant 0 : index
    %c0_61 = arith.constant 0 : index
    %93 = vector.load %arg6[%c0_58, %c7_59, %c0_60, %c0_61] : memref<1x12x1x256xi8, #tpu.memory_space<vmem>>, vector<1x1x1x256xi8>
    %94 = vector.shape_cast %93 : vector<1x1x1x256xi8> to vector<1x256xi8>
    %95 = arith.sitofp %94 : vector<1x256xi8> to vector<1x256xf32>
    %96 = vector.broadcast %13 : f32 to vector<1x256xf32>
    %97 = arith.mulf %96, %95 : vector<1x256xf32>
    %98 = arith.addf %92, %97 : vector<1x256xf32>
    %c0_62 = arith.constant 0 : index
    %c8_63 = arith.constant 8 : index
    %c0_64 = arith.constant 0 : index
    %c0_65 = arith.constant 0 : index
    %99 = vector.load %arg6[%c0_62, %c8_63, %c0_64, %c0_65] : memref<1x12x1x256xi8, #tpu.memory_space<vmem>>, vector<1x1x1x256xi8>
    %100 = vector.shape_cast %99 : vector<1x1x1x256xi8> to vector<1x256xi8>
    %101 = arith.sitofp %100 : vector<1x256xi8> to vector<1x256xf32>
    %102 = vector.broadcast %14 : f32 to vector<1x256xf32>
    %103 = arith.mulf %102, %101 : vector<1x256xf32>
    %104 = arith.addf %98, %103 : vector<1x256xf32>
    %c0_66 = arith.constant 0 : index
    %c9_67 = arith.constant 9 : index
    %c0_68 = arith.constant 0 : index
    %c0_69 = arith.constant 0 : index
    %105 = vector.load %arg6[%c0_66, %c9_67, %c0_68, %c0_69] : memref<1x12x1x256xi8, #tpu.memory_space<vmem>>, vector<1x1x1x256xi8>
    %106 = vector.shape_cast %105 : vector<1x1x1x256xi8> to vector<1x256xi8>
    %107 = arith.sitofp %106 : vector<1x256xi8> to vector<1x256xf32>
    %108 = vector.broadcast %15 : f32 to vector<1x256xf32>
    %109 = arith.mulf %108, %107 : vector<1x256xf32>
    %110 = arith.addf %104, %109 : vector<1x256xf32>
    %c0_70 = arith.constant 0 : index
    %c10_71 = arith.constant 10 : index
    %c0_72 = arith.constant 0 : index
    %c0_73 = arith.constant 0 : index
    %111 = vector.load %arg6[%c0_70, %c10_71, %c0_72, %c0_73] : memref<1x12x1x256xi8, #tpu.memory_space<vmem>>, vector<1x1x1x256xi8>
    %112 = vector.shape_cast %111 : vector<1x1x1x256xi8> to vector<1x256xi8>
    %113 = arith.sitofp %112 : vector<1x256xi8> to vector<1x256xf32>
    %114 = vector.broadcast %16 : f32 to vector<1x256xf32>
    %115 = arith.mulf %114, %113 : vector<1x256xf32>
    %116 = arith.addf %110, %115 : vector<1x256xf32>
    %c0_74 = arith.constant 0 : index
    %c11_75 = arith.constant 11 : index
    %c0_76 = arith.constant 0 : index
    %c0_77 = arith.constant 0 : index
    %117 = vector.load %arg6[%c0_74, %c11_75, %c0_76, %c0_77] : memref<1x12x1x256xi8, #tpu.memory_space<vmem>>, vector<1x1x1x256xi8>
    %118 = vector.shape_cast %117 : vector<1x1x1x256xi8> to vector<1x256xi8>
    %119 = arith.sitofp %118 : vector<1x256xi8> to vector<1x256xf32>
    %120 = vector.broadcast %17 : f32 to vector<1x256xf32>
    %121 = arith.mulf %120, %119 : vector<1x256xf32>
    %122 = arith.addf %116, %121 : vector<1x256xf32>
    %c0_78 = arith.constant 0 : index
    %c0_79 = arith.constant 0 : index
    %c0_80 = arith.constant 0 : index
    %c0_81 = arith.constant 0 : index
    %123 = vector.load %arg7[%c0_78, %c0_79, %c0_80, %c0_81] : memref<1x1x1x256xf32, #tpu.memory_space<vmem>>, vector<1x1x1x256xf32>
    %124 = vector.shape_cast %123 : vector<1x1x1x256xf32> to vector<1x256xf32>
    %125 = vector.shape_cast %122 : vector<1x256xf32> to vector<1x1x1x256xf32>
    tpu.vector_store %arg7[%c0_78, %c0_79, %c0_80, %c0_81], %125 {strides = array<i32>} : memref<1x1x1x256xf32, #tpu.memory_space<vmem>>, vector<1x1x1x256xf32>,
    return
  }
  func.func @transform_0(%arg0: i32, %arg1: i32) -> i32 {
    %c0_i32 = arith.constant 0 : i32
    %c0_i32_0 = arith.constant 0 : i32
    return %c0_i32 : i32
  }
  func.func @transform_1(%arg0: i32, %arg1: i32) -> i32 {
    %c0_i32 = arith.constant 0 : i32
    %c0_i32_0 = arith.constant 0 : i32
    return %c0_i32 : i32
  }
  func.func @transform_2(%arg0: i32, %arg1: i32) -> i32 {
    %c0_i32 = arith.constant 0 : i32
    %c0_i32_0 = arith.constant 0 : i32
    return %c0_i32 : i32
  }
  func.func @transform_3(%arg0: i32, %arg1: i32) -> (i32, i32, i32, i32) {
    %c0_i32 = arith.constant 0 : i32
    %c0_i32_0 = arith.constant 0 : i32
    %c0_i32_1 = arith.constant 0 : i32
    return %arg0, %c0_i32, %arg1, %c0_i32_0 : i32, i32, i32, i32
  }
  func.func @transform_4(%arg0: i32, %arg1: i32) -> (i32, i32, i32, i32) {
    %c0_i32 = arith.constant 0 : i32
    %c0_i32_0 = arith.constant 0 : i32
    %c0_i32_1 = arith.constant 0 : i32
    return %arg0, %c0_i32, %arg1, %c0_i32_0 : i32, i32, i32, i32
  }
  func.func @transform_5(%arg0: i32, %arg1: i32) -> (i32, i32, i32, i32) {
    %c0_i32 = arith.constant 0 : i32
    %c0_i32_0 = arith.constant 0 : i32
    %c0_i32_1 = arith.constant 0 : i32
    return %arg0, %c0_i32, %arg1, %c0_i32_0 : i32, i32, i32, i32
  }
}

</mosaic_0001>

<llo_original>
// kernel: tpu_custom_call.1
$region0: #{tpu_custom_call.1}
  #allocation0 [shape = 'u32[]', space=smem, size = 0x4, offset = 0x4, fixed_abs, tag = 'smem constant byte address 0x4 - core index']
  #allocation1 [shape = 'u32[144,128]{1,0:T(1,128)}', space=vmem, size = 0x12000, scoped, tag = 'internal scratch']
  %s0 = inlined_call_operand.vmem [shape: f32[6], index: 0, kind: input, shape index: {}]
  %s1 = inlined_call_operand.vmem [shape: f32[12], index: 1, kind: input, shape index: {}]
  %s2 = inlined_call_operand.vmem [shape: f32[2], index: 2, kind: input, shape index: {}]
  %s3 = inlined_call_operand.vmem [shape: f32[2,6,1,256], index: 3, kind: input, shape index: {}]
  %s4 = inlined_call_operand.vmem [shape: s8[2,12,1,256], index: 4, kind: input, shape index: {}]
  %s5 = inlined_call_operand.hbm [shape: f32[2,1,1,256], index: 5, kind: output, shape index: {}]
  %s6 = sld [smem:[#allocation0]]
  $region65: #{tpu_custom_call.1} parent=0
    _
  %s8 = ssub.s32 1, %s6
  %s9 = scalar_select 0, %s8, %s6
  $region1: #{tpu_custom_call.1} parent=0
    #allocation2 [shape = 'u8[512]{0}', space=smem, size = 0x200, scoped, tag = 'input window, operand 0, single buffered']
    #allocation3 [shape = 's32[2]{0}', space=sflag, size = 0x8, scoped, tag = 'scoped memory for tpu_custom_call.1']
    #allocation4 [shape = 's32[2]{0}', space=sflag, size = 0x8, scoped, tag = 'scoped memory for tpu_custom_call.1']
    #allocation5 [shape = 'u8[512]{0}', space=smem, size = 0x200, scoped, tag = 'input window, operand 1, single buffered']
    #allocation6 [shape = 's32[1]{0}', space=sflag, size = 0x4, scoped, tag = 'scoped memory for tpu_custom_call.1']
    #allocation7 [shape = 'u8[512]{0}', space=smem, size = 0x200, scoped, tag = 'input window, operand 2, single buffered']
    #allocation8 [shape = 'u8[2048]{0}', space=vmem, size = 0x800, scoped, tag = 'output window, operand 0']
    %10 = vsyncpa [#allocation4], 0
    %11 = vsyncpa [#allocation6], 0
    %12 = vsyncpa [#allocation3], 0
    %s13 = scalar_lea.sflag [#allocation3], 1
    %14 = vsyncpa %s13, 0
    loop: start=0, step=1, limit=4
    $region2: #{tpu_custom_call.1} parent=1 // loop_pre_header
      _
    $region3: #{tpu_custom_call.1} parent=1 // loop_header
      %s16 = sphi 0, %s20
      %p17 = scmp.ge.s32.totalorder %s16, 4
      %s23 = sphi 0, %s35
      %s24 = sphi 0, %s31
      %s25 = sphi 0, %s23
      %s26 = sphi 0, %s24
      %s27 = sphi 0, %s25
      %s28 = sphi 0, %s26
      %s36 = sphi 0, %s36
      %s38 = sphi 0, %s36
      %s39 = sphi 0, %s38
      %s53 = sphi 0, %s39
      %s57 = sphi 0, %s57
      %s59 = sphi 0, %s57
      %s60 = sphi 0, %s59
      %s74 = sphi 0, %s60
      %s78 = sphi 0, %s78
      %s80 = sphi 0, %s78
      %s81 = sphi 0, %s80
      %s95 = sphi 0, %s81
      %s103 = sphi 0, %s105
      %s106 = sphi 0, %s103
      %s107 = sphi 0, %s106
      %s123 = sphi 0, %s107
      %s131 = sphi 0, %s133
      %s134 = sphi 0, %s131
      %s135 = sphi 0, %s134
      %s151 = sphi 0, %s135
      %s159 = sphi 0, %s161
      %s162 = sphi 0, %s159
      %s163 = sphi 0, %s162
      %s179 = sphi 0, %s163
    $region4: #{tpu_custom_call.1} parent=1 // loop_header_branch
      %19 = sbr.rel (%p17) target = $region8
    $region5: #{tpu_custom_call.1} parent=1 // loop_body
      %s21 = ssub.s32 %s16, 1
      %s22 = ssub.s32 %s16, 2
      %s29 = sadd.s32 1, %s24
      %p30 = scmp.ge.s32.totalorder %s29, 1
      %s31 = scalar_select %p30, 0, %s29
      %s32 = sadd.s32 1, %s23
      %s33 = scalar_select %p30, %s32, %s23
      %p34 = scmp.ge.s32.totalorder %s33, 2
      %s35 = scalar_select %p34, 0, %s33
      %s37 = sadd.s32 %s36, 1
      %p40 = scmp.eq.s32.totalorder %s16, 1
      %p41 = scmp.ne.s32.totalorder %s36, %s38
      %p42 = scmp.eq.s32.totalorder %s16, 0
      %p43 = por %p41, %p42
      %p44 = scmp.ne.s32.totalorder %s36, %s38
      %p45 = scmp.eq.s32.totalorder %s21, 1
      %p46 = por %p44, %p45
      %p47 = scmp.ne.s32.totalorder %s38, %s39
      %p48 = scmp.eq.s32.totalorder %s21, 0
      %p49 = por %p47, %p48
      %p50 = scmp.ne.s32.totalorder %s38, %s39
      %p51 = scmp.eq.s32.totalorder %s22, 1
      %p52 = por %p50, %p51
      %p54 = scmp.ne.s32.totalorder %s39, %s53
      %p55 = scmp.eq.s32.totalorder %s22, 0
      %p56 = por %p54, %p55
      %s58 = sadd.s32 %s57, 1
      %p61 = scmp.eq.s32.totalorder %s16, 1
      %p62 = scmp.ne.s32.totalorder %s57, %s59
      %p63 = scmp.eq.s32.totalorder %s16, 0
      %p64 = por %p62, %p63
      %p65 = scmp.ne.s32.totalorder %s57, %s59
      %p66 = scmp.eq.s32.totalorder %s21, 1
      %p67 = por %p65, %p66
      %p68 = scmp.ne.s32.totalorder %s59, %s60
      %p69 = scmp.eq.s32.totalorder %s21, 0
      %p70 = por %p68, %p69
      %p71 = scmp.ne.s32.totalorder %s59, %s60
      %p72 = scmp.eq.s32.totalorder %s22, 1
      %p73 = por %p71, %p72
      %p75 = scmp.ne.s32.totalorder %s60, %s74
      %p76 = scmp.eq.s32.totalorder %s22, 0
      %p77 = por %p75, %p76
      %s79 = sadd.s32 %s78, 1
      %p82 = scmp.eq.s32.totalorder %s16, 1
      %p83 = scmp.ne.s32.totalorder %s78, %s80
      %p84 = scmp.eq.s32.totalorder %s16, 0
      %p85 = por %p83, %p84
      %p86 = scmp.ne.s32.totalorder %s78, %s80
      %p87 = scmp.eq.s32.totalorder %s21, 1
      %p88 = por %p86, %p87
      %p89 = scmp.ne.s32.totalorder %s80, %s81
      %p90 = scmp.eq.s32.totalorder %s21, 0
      %p91 = por %p89, %p90
      %p92 = scmp.ne.s32.totalorder %s80, %s81
      %p93 = scmp.eq.s32.totalorder %s22, 1
      %p94 = por %p92, %p93
      %p96 = scmp.ne.s32.totalorder %s81, %s95
      %p97 = scmp.eq.s32.totalorder %s22, 0
      %p98 = por %p96, %p97
      %s99 = ssub.s32 %s23, %s35
      %s100 = ssub.s32 %s24, %s31
      %s101 = sor.u32 %s99, %s100
      %p102 = scmp.eq.s32.totalorder %s101, 0
      %s104 = sadd.s32 %s103, 1
      %s105 = scalar_select %p102, %s103, %s104
      %p108 = pneg %p102
      %p109 = scmp.eq.s32.totalorder %s16, 1
      %p110 = por %p108, %p109
      %p111 = scmp.ne.s32.totalorder %s103, %s106
      %p112 = scmp.eq.s32.totalorder %s16, 0
      %p113 = por %p111, %p112
      %p114 = scmp.ne.s32.totalorder %s103, %s106
      %p115 = scmp.eq.s32.totalorder %s21, 1
      %p116 = por %p114, %p115
      %p117 = scmp.ne.s32.totalorder %s106, %s107
      %p118 = scmp.eq.s32.totalorder %s21, 0
      %p119 = por %p117, %p118
      %p120 = scmp.ne.s32.totalorder %s106, %s107
      %p121 = scmp.eq.s32.totalorder %s22, 1
      %p122 = por %p120, %p121
      %p124 = scmp.ne.s32.totalorder %s107, %s123
      %p125 = scmp.eq.s32.totalorder %s22, 0
      %p126 = por %p124, %p125
      %s127 = ssub.s32 %s23, %s35
      %s128 = ssub.s32 %s24, %s31
      %s129 = sor.u32 %s127, %s128
      %p130 = scmp.eq.s32.totalorder %s129, 0
      %s132 = sadd.s32 %s131, 1
      %s133 = scalar_select %p130, %s131, %s132
      %p136 = pneg %p130
      %p137 = scmp.eq.s32.totalorder %s16, 1
      %p138 = por %p136, %p137
      %p139 = scmp.ne.s32.totalorder %s131, %s134
      %p140 = scmp.eq.s32.totalorder %s16, 0
      %p141 = por %p139, %p140
      %p142 = scmp.ne.s32.totalorder %s131, %s134
      %p143 = scmp.eq.s32.totalorder %s21, 1
      %p144 = por %p142, %p143
      %p145 = scmp.ne.s32.totalorder %s134, %s135
      %p146 = scmp.eq.s32.totalorder %s21, 0
      %p147 = por %p145, %p146
      %p148 = scmp.ne.s32.totalorder %s134, %s135
      %p149 = scmp.eq.s32.totalorder %s22, 1
      %p150 = por %p148, %p149
      %p152 = scmp.ne.s32.totalorder %s135, %s151
      %p153 = scmp.eq.s32.totalorder %s22, 0
      %p154 = por %p152, %p153
      %s155 = ssub.s32 %s23, %s35
      %s156 = ssub.s32 %s24, %s31
      %s157 = sor.u32 %s155, %s156
      %p158 = scmp.eq.s32.totalorder %s157, 0
      %s160 = sadd.s32 %s159, 1
      %s161 = scalar_select %p158, %s159, %s160
      %p164 = pneg %p158
      %p165 = scmp.eq.s32.totalorder %s16, 1
      %p166 = por %p164, %p165
      %p167 = scmp.ne.s32.totalorder %s159, %s162
      %p168 = scmp.eq.s32.totalorder %s16, 0
      %p169 = por %p167, %p168
      %p170 = scmp.ne.s32.totalorder %s159, %s162
      %p171 = scmp.eq.s32.totalorder %s21, 1
      %p172 = por %p170, %p171
      %p173 = scmp.ne.s32.totalorder %s162, %s163
      %p174 = scmp.eq.s32.totalorder %s21, 0
      %p175 = por %p173, %p174
      %p176 = scmp.ne.s32.totalorder %s162, %s163
      %p177 = scmp.eq.s32.totalorder %s22, 1
      %p178 = por %p176, %p177
      %p180 = scmp.ne.s32.totalorder %s163, %s179
      %p181 = scmp.eq.s32.totalorder %s22, 0
      %p182 = por %p180, %p181
      %p183 = scmp.le.s32.totalorder 1, %s16
      %p184 = scmp.lt.s32.totalorder %s16, 3
      %p185 = pnand %p183, %p184
      %p186 = pneg %p185
      // Predicated region
      $region9: #{tpu_custom_call.1} parent=5 // pred_check
        _
      $region10: #{tpu_custom_call.1} parent=5 // pred_check_branch
        %188 = sbr.rel (%p185) target = $region12
      $region11: #{tpu_custom_call.1} parent=5 // pred_region
        %s189 = ssub.s32 %s16, 1
        // Predicated region
        $region13: #{tpu_custom_call.1} parent=11 // pred_check
          %p190 = pneg %p49
        $region14: #{tpu_custom_call.1} parent=11 // pred_check_branch
          %192 = sbr.rel (%p190) target = $region16
        $region15: #{tpu_custom_call.1} parent=11 // pred_region
          %s194 = ssub.s32 16, 16
          %195 = vsyncadd [#allocation4], %s194
          %s197 = sshll.u32 %s0, 4
          %s198 = int_to_ptr.vmem [resolvable:$true] %s197
          %200 = dma.vmem_to_smem %s198, 16, [#allocation2], [#allocation4]
        $region16: #{tpu_custom_call.1} parent=11 // pred_fallthru
          _
        // Predicated region
        $region17: #{tpu_custom_call.1} parent=11 // pred_check
          %p201 = pneg %p70
        $region18: #{tpu_custom_call.1} parent=11 // pred_check_branch
          %203 = sbr.rel (%p201) target = $region20
        $region19: #{tpu_custom_call.1} parent=11 // pred_region
          %s205 = ssub.s32 16, 16
          %206 = vsyncadd [#allocation6], %s205
          %s208 = sshll.u32 %s1, 4
          %s209 = int_to_ptr.vmem [resolvable:$true] %s208
          %211 = dma.vmem_to_smem %s209, 16, [#allocation5], [#allocation6]
        $region20: #{tpu_custom_call.1} parent=11 // pred_fallthru
          _
        // Predicated region
        $region21: #{tpu_custom_call.1} parent=11 // pred_check
          %p212 = pneg %p91
        $region22: #{tpu_custom_call.1} parent=11 // pred_check_branch
          %214 = sbr.rel (%p212) target = $region24
        $region23: #{tpu_custom_call.1} parent=11 // pred_region
          %s216 = ssub.s32 16, 16
          %217 = vsyncadd [#allocation6], %s216
          %s219 = sshll.u32 %s2, 4
          %s220 = int_to_ptr.vmem [resolvable:$true] %s219
          %222 = dma.vmem_to_smem %s220, 16, [#allocation7], [#allocation6]
        $region24: #{tpu_custom_call.1} parent=11 // pred_fallthru
          _
      $region12: #{tpu_custom_call.1} parent=5 // pred_fallthru
        _
      %p223 = scmp.lt.s32.totalorder %s16, 2
      // Predicated region
      $region25: #{tpu_custom_call.1} parent=5 // pred_check
        %p224 = pneg %p223
      $region26: #{tpu_custom_call.1} parent=5 // pred_check_branch
        %226 = sbr.rel (%p224) target = $region28
      $region27: #{tpu_custom_call.1} parent=5 // pred_region
        // Predicated region
        $region29: #{tpu_custom_call.1} parent=27 // pred_check
          %p227 = pneg %p113
        $region30: #{tpu_custom_call.1} parent=27 // pred_check_branch
          %229 = sbr.rel (%p227) target = $region32
        $region31: #{tpu_custom_call.1} parent=27 // pred_region
          %p230 = scmp.lt.s32.totalorder %s23, 1
          %s231 = scalar_select %p230, %s23, 1
          %p232 = scmp.lt.s32.totalorder %s24, 0
          %s233 = scalar_select %p232, %s24, 0
          %s234 = smul.addr %s233, 2
          %s235 = smul.addr %s231, 12
          %s236 = sadd.s32 %s234, %s235
          %s237 = scalar_lea.vmem %s3, %s236
        $region32: #{tpu_custom_call.1} parent=27 // pred_fallthru
          _
        // Predicated region
        $region33: #{tpu_custom_call.1} parent=27 // pred_check
          %p238 = pneg %p141
        $region34: #{tpu_custom_call.1} parent=27 // pred_check_branch
          %240 = sbr.rel (%p238) target = $region36
        $region35: #{tpu_custom_call.1} parent=27 // pred_region
          %p241 = scmp.lt.s32.totalorder %s23, 1
          %s242 = scalar_select %p241, %s23, 1
          %p243 = scmp.lt.s32.totalorder %s24, 0
          %s244 = scalar_select %p243, %s24, 0
          %s245 = smul.addr %s244, 2
          %s246 = smul.addr %s242, 24
          %s247 = sadd.s32 %s245, %s246
          %s248 = scalar_lea.vmem %s4, %s247
        $region36: #{tpu_custom_call.1} parent=27 // pred_fallthru
          _
      $region28: #{tpu_custom_call.1} parent=5 // pred_fallthru
        _
      %p249 = scmp.le.s32.totalorder 1, %s16
      %p250 = scmp.lt.s32.totalorder %s16, 3
      %p251 = pnand %p249, %p250
      %p252 = pneg %p251
      // Predicated region
      $region37: #{tpu_custom_call.1} parent=5 // pred_check
        _
      $region38: #{tpu_custom_call.1} parent=5 // pred_check_branch
        %254 = sbr.rel (%p251) target = $region40
      $region39: #{tpu_custom_call.1} parent=5 // pred_region
        %s255 = ssub.s32 %s16, 1
        // Predicated region
        $region41: #{tpu_custom_call.1} parent=39 // pred_check
          %p256 = pneg %p49
        $region42: #{tpu_custom_call.1} parent=39 // pred_check_branch
          %258 = sbr.rel (%p256) target = $region44
        $region43: #{tpu_custom_call.1} parent=39 // pred_region
          %259 = dma.done [#allocation4], 16
        $region44: #{tpu_custom_call.1} parent=39 // pred_fallthru
          _
        // Predicated region
        $region45: #{tpu_custom_call.1} parent=39 // pred_check
          %p260 = pneg %p70
        $region46: #{tpu_custom_call.1} parent=39 // pred_check_branch
          %262 = sbr.rel (%p260) target = $region48
        $region47: #{tpu_custom_call.1} parent=39 // pred_region
          %263 = dma.done [#allocation6], 16
        $region48: #{tpu_custom_call.1} parent=39 // pred_fallthru
          _
        // Predicated region
        $region49: #{tpu_custom_call.1} parent=39 // pred_check
          %p264 = pneg %p91
        $region50: #{tpu_custom_call.1} parent=39 // pred_check_branch
          %266 = sbr.rel (%p264) target = $region52
        $region51: #{tpu_custom_call.1} parent=39 // pred_region
          %267 = dma.done [#allocation6], 16
        $region52: #{tpu_custom_call.1} parent=39 // pred_fallthru
          _
        %268 = sfence
        %p269 = pneg %p49
        %p270 = pneg %p46
        %p271 = pneg %p70
        %p272 = pneg %p67
        %p273 = pneg %p91
        %p274 = pneg %p88
        %p275 = scmp.lt.s32.totalorder %s25, 1
        %s276 = scalar_select %p275, %s25, 1
        %p277 = scmp.lt.s32.totalorder %s26, 0
        %s278 = scalar_select %p277, %s26, 0
        %s279 = smul.addr %s278, 2
        %s280 = smul.addr %s276, 12
        %s281 = sadd.s32 %s279, %s280
        %s282 = scalar_lea.vmem %s3, %s281
        %p283 = pneg %p119
        %p284 = pneg %p116
        %p285 = scmp.lt.s32.totalorder %s25, 1
        %s286 = scalar_select %p285, %s25, 1
        %p287 = scmp.lt.s32.totalorder %s26, 0
        %s288 = scalar_select %p287, %s26, 0
        %s289 = smul.addr %s288, 2
        %s290 = smul.addr %s286, 24
        %s291 = sadd.s32 %s289, %s290
        %s292 = scalar_lea.vmem %s4, %s291
        %p293 = pneg %p147
        %p294 = pneg %p144
        %p295 = pneg %p175
        %p296 = pneg %p172
        %s297 = sand.u32 %s162, 1
        %s298 = scalar_lea.sflag [#allocation3], %s297
        %s299 = sand.u32 %s162, 1
        %s300 = smul.addr %s299, 2
        %s301 = scalar_lea.vmem [#allocation8], %s300
        %p302 = scmp.lt.s32.totalorder %s25, 1
        %s303 = scalar_select %p302, %s25, 1
        %p304 = scmp.lt.s32.totalorder %s26, 0
        %s305 = scalar_select %p304, %s26, 0
        %s306 = smul.addr %s305, 2
        %s307 = smul.addr %s303, 12
        %s308 = sadd.s32 %s306, %s307
        %s309 = scalar_lea.vmem %s3, %s308
        %p310 = scmp.lt.s32.totalorder %s25, 1
        %s311 = scalar_select %p310, %s25, 1
        %p312 = scmp.lt.s32.totalorder %s26, 0
        %s313 = scalar_select %p312, %s26, 0
        %s314 = smul.addr %s313, 2
        %s315 = smul.addr %s311, 24
        %s316 = sadd.s32 %s314, %s315
        %s317 = scalar_lea.vmem %s4, %s316
        %s318 = sld [smem:[#allocation2]]
        %s319 = sld [smem:[#allocation2 + $0x1]]
        %s320 = sld [smem:[#allocation2 + $0x2]]
        %s321 = sld [smem:[#allocation2 + $0x3]]
        %s322 = sld [smem:[#allocation2 + $0x4]]
        %s323 = sld [smem:[#allocation2 + $0x5]]
        %s324 = sld [smem:[#allocation5]]
        %s325 = sld [smem:[#allocation5 + $0x1]]
        %s326 = sld [smem:[#allocation5 + $0x2]]
        %s327 = sld [smem:[#allocation5 + $0x3]]
        %s328 = sld [smem:[#allocation5 + $0x4]]
        %s329 = sld [smem:[#allocation5 + $0x5]]
        %s330 = sld [smem:[#allocation5 + $0x6]]
        %s331 = sld [smem:[#allocation5 + $0x7]]
        %s332 = sld [smem:[#allocation5 + $0x8]]
        %s333 = sld [smem:[#allocation5 + $0x9]]
        %s334 = sld [smem:[#allocation5 + $0xa]]
        %s335 = sld [smem:[#allocation5 + $0xb]]
        %s336 = sld [smem:[#allocation7 + %s25]]
        %v337 = vstv %s336
        %v338 = vld [vmem:[%s309] sm:$0x3]
        %v339 = vstv %s318
        %v340 = vmul.f32 %v339, %v338
        %v341 = vadd.f32 %v337, %v340
        %s342 = scalar_lea.vmem %s309, 2
        %v343 = vld [vmem:[%s342] sm:$0x3]
        %v344 = vstv %s319
        %v345 = vmul.f32 %v344, %v343
        %v346 = vadd.f32 %v341, %v345
        %s347 = scalar_lea.vmem %s309, 4
        %v348 = vld [vmem:[%s347] sm:$0x3]
        %v349 = vstv %s320
        %v350 = vmul.f32 %v349, %v348
        %v351 = vadd.f32 %v346, %v350
        %s352 = scalar_lea.vmem %s309, 6
        %v353 = vld [vmem:[%s352] sm:$0x3]
        %v354 = vstv %s321
        %v355 = vmul.f32 %v354, %v353
        %v356 = vadd.f32 %v351, %v355
        %s357 = scalar_lea.vmem %s309, 8
        %v358 = vld [vmem:[%s357] sm:$0x3]
        %v359 = vstv %s322
        %v360 = vmul.f32 %v359, %v358
        %v361 = vadd.f32 %v356, %v360
        %s362 = scalar_lea.vmem %s309, 10
        %v363 = vld [vmem:[%s362] sm:$0x3]
        %v364 = vstv %s323
        %v365 = vmul.f32 %v364, %v363
        %v366 = vadd.f32 %v361, %v365
        %v367 = vld [vmem:[%s317] sm:$0x3]
        %v368 = vunpack.c.0.s8 %v367
        %v369 = vcvt.s32.f32 %v368
        %v370 = vstv %s324
        %v371 = vmul.f32 %v370, %v369
        %v374 = vunpack.c.l.s4 1966171168
        %v375 = vunpack.c.0.s8 %v374
        %v376 = vlaneseq
        %v377 = vshrl.u32 %v376, 7
        %v378 = vsub.s32 %v375, %v377
        %v379 = vrot.slane %v371, %v378
        %v381 = vunpack.c.l.s4 1966171168
        %v382 = vunpack.c.0.s8 %v381
        %v383 = vlaneseq
        %v384 = vshrl.u32 %v383, 7
        %v385 = vsub.s32 %v382, %v384
        %v386 = vrot.slane %v379, %v385
        %v388 = vadd.f32 %v366, %v386
        %s389 = scalar_lea.vmem %s317, 2
        %v390 = vld [vmem:[%s389] sm:$0x3]
        %v391 = vunpack.c.0.s8 %v390
        %v392 = vcvt.s32.f32 %v391
        %v393 = vstv %s325
        %v394 = vmul.f32 %v393, %v392
        %v397 = vunpack.c.l.s4 1966171168
        %v398 = vunpack.c.0.s8 %v397
        %v399 = vlaneseq
        %v400 = vshrl.u32 %v399, 7
        %v401 = vsub.s32 %v398, %v400
        %v402 = vrot.slane %v394, %v401
        %v404 = vunpack.c.l.s4 1966171168
        %v405 = vunpack.c.0.s8 %v404
        %v406 = vlaneseq
        %v407 = vshrl.u32 %v406, 7
        %v408 = vsub.s32 %v405, %v407
        %v409 = vrot.slane %v402, %v408
        %v411 = vadd.f32 %v388, %v409
        %s412 = scalar_lea.vmem %s317, 4
        %v413 = vld [vmem:[%s412] sm:$0x3]
        %v414 = vunpack.c.0.s8 %v413
        %v415 = vcvt.s32.f32 %v414
        %v416 = vstv %s326
        %v417 = vmul.f32 %v416, %v415
        %v420 = vunpack.c.l.s4 1966171168
        %v421 = vunpack.c.0.s8 %v420
        %v422 = vlaneseq
        %v423 = vshrl.u32 %v422, 7
        %v424 = vsub.s32 %v421, %v423
        %v425 = vrot.slane %v417, %v424
        %v427 = vunpack.c.l.s4 1966171168
        %v428 = vunpack.c.0.s8 %v427
        %v429 = vlaneseq
        %v430 = vshrl.u32 %v429, 7
        %v431 = vsub.s32 %v428, %v430
        %v432 = vrot.slane %v425, %v431
        %v434 = vadd.f32 %v411, %v432
        %s435 = scalar_lea.vmem %s317, 6
        %v436 = vld [vmem:[%s435] sm:$0x3]
        %v437 = vunpack.c.0.s8 %v436
        %v438 = vcvt.s32.f32 %v437
        %v439 = vstv %s327
        %v440 = vmul.f32 %v439, %v438
        %v443 = vunpack.c.l.s4 1966171168
        %v444 = vunpack.c.0.s8 %v443
        %v445 = vlaneseq
        %v446 = vshrl.u32 %v445, 7
        %v447 = vsub.s32 %v444, %v446
        %v448 = vrot.slane %v440, %v447
        %v450 = vunpack.c.l.s4 1966171168
        %v451 = vunpack.c.0.s8 %v450
        %v452 = vlaneseq
        %v453 = vshrl.u32 %v452, 7
        %v454 = vsub.s32 %v451, %v453
        %v455 = vrot.slane %v448, %v454
        %v457 = vadd.f32 %v434, %v455
        %s458 = scalar_lea.vmem %s317, 8
        %v459 = vld [vmem:[%s458] sm:$0x3]
        %v460 = vunpack.c.0.s8 %v459
        %v461 = vcvt.s32.f32 %v460
        %v462 = vstv %s328
        %v463 = vmul.f32 %v462, %v461
        %v466 = vunpack.c.l.s4 1966171168
        %v467 = vunpack.c.0.s8 %v466
        %v468 = vlaneseq
        %v469 = vshrl.u32 %v468, 7
        %v470 = vsub.s32 %v467, %v469
        %v471 = vrot.slane %v463, %v470
        %v473 = vunpack.c.l.s4 1966171168
        %v474 = vunpack.c.0.s8 %v473
        %v475 = vlaneseq
        %v476 = vshrl.u32 %v475, 7
        %v477 = vsub.s32 %v474, %v476
        %v478 = vrot.slane %v471, %v477
        %v480 = vadd.f32 %v457, %v478
        %s481 = scalar_lea.vmem %s317, 10
        %v482 = vld [vmem:[%s481] sm:$0x3]
        %v483 = vunpack.c.0.s8 %v482
        %v484 = vcvt.s32.f32 %v483
        %v485 = vstv %s329
        %v486 = vmul.f32 %v485, %v484
        %v489 = vunpack.c.l.s4 1966171168
        %v490 = vunpack.c.0.s8 %v489
        %v491 = vlaneseq
        %v492 = vshrl.u32 %v491, 7
        %v493 = vsub.s32 %v490, %v492
        %v494 = vrot.slane %v486, %v493
        %v496 = vunpack.c.l.s4 1966171168
        %v497 = vunpack.c.0.s8 %v496
        %v498 = vlaneseq
        %v499 = vshrl.u32 %v498, 7
        %v500 = vsub.s32 %v497, %v499
        %v501 = vrot.slane %v494, %v500
        %v503 = vadd.f32 %v480, %v501
        %s504 = scalar_lea.vmem %s317, 12
        %v505 = vld [vmem:[%s504] sm:$0x3]
        %v506 = vunpack.c.0.s8 %v505
        %v507 = vcvt.s32.f32 %v506
        %v508 = vstv %s330
        %v509 = vmul.f32 %v508, %v507
        %v512 = vunpack.c.l.s4 1966171168
        %v513 = vunpack.c.0.s8 %v512
        %v514 = vlaneseq
        %v515 = vshrl.u32 %v514, 7
        %v516 = vsub.s32 %v513, %v515
        %v517 = vrot.slane %v509, %v516
        %v519 = vunpack.c.l.s4 1966171168
        %v520 = vunpack.c.0.s8 %v519
        %v521 = vlaneseq
        %v522 = vshrl.u32 %v521, 7
        %v523 = vsub.s32 %v520, %v522
        %v524 = vrot.slane %v517, %v523
        %v526 = vadd.f32 %v503, %v524
        %s527 = scalar_lea.vmem %s317, 14
        %v528 = vld [vmem:[%s527] sm:$0x3]
        %v529 = vunpack.c.0.s8 %v528
        %v530 = vcvt.s32.f32 %v529
        %v531 = vstv %s331
        %v532 = vmul.f32 %v531, %v530
        %v535 = vunpack.c.l.s4 1966171168
        %v536 = vunpack.c.0.s8 %v535
        %v537 = vlaneseq
        %v538 = vshrl.u32 %v537, 7
        %v539 = vsub.s32 %v536, %v538
        %v540 = vrot.slane %v532, %v539
        %v542 = vunpack.c.l.s4 1966171168
        %v543 = vunpack.c.0.s8 %v542
        %v544 = vlaneseq
        %v545 = vshrl.u32 %v544, 7
        %v546 = vsub.s32 %v543, %v545
        %v547 = vrot.slane %v540, %v546
        %v549 = vadd.f32 %v526, %v547
        %s550 = scalar_lea.vmem %s317, 16
        %v551 = vld [vmem:[%s550] sm:$0x3]
        %v552 = vunpack.c.0.s8 %v551
        %v553 = vcvt.s32.f32 %v552
        %v554 = vstv %s332
        %v555 = vmul.f32 %v554, %v553
        %v558 = vunpack.c.l.s4 1966171168
        %v559 = vunpack.c.0.s8 %v558
        %v560 = vlaneseq
        %v561 = vshrl.u32 %v560, 7
        %v562 = vsub.s32 %v559, %v561
        %v563 = vrot.slane %v555, %v562
        %v565 = vunpack.c.l.s4 1966171168
        %v566 = vunpack.c.0.s8 %v565
        %v567 = vlaneseq
        %v568 = vshrl.u32 %v567, 7
        %v569 = vsub.s32 %v566, %v568
        %v570 = vrot.slane %v563, %v569
        %v572 = vadd.f32 %v549, %v570
        %s573 = scalar_lea.vmem %s317, 18
        %v574 = vld [vmem:[%s573] sm:$0x3]
        %v575 = vunpack.c.0.s8 %v574
        %v576 = vcvt.s32.f32 %v575
        %v577 = vstv %s333
        %v578 = vmul.f32 %v577, %v576
        %v581 = vunpack.c.l.s4 1966171168
        %v582 = vunpack.c.0.s8 %v581
        %v583 = vlaneseq
        %v584 = vshrl.u32 %v583, 7
        %v585 = vsub.s32 %v582, %v584
        %v586 = vrot.slane %v578, %v585
        %v588 = vunpack.c.l.s4 1966171168
        %v589 = vunpack.c.0.s8 %v588
        %v590 = vlaneseq
        %v591 = vshrl.u32 %v590, 7
        %v592 = vsub.s32 %v589, %v591
        %v593 = vrot.slane %v586, %v592
        %v595 = vadd.f32 %v572, %v593
        %s596 = scalar_lea.vmem %s317, 20
        %v597 = vld [vmem:[%s596] sm:$0x3]
        %v598 = vunpack.c.0.s8 %v597
        %v599 = vcvt.s32.f32 %v598
        %v600 = vstv %s334
        %v601 = vmul.f32 %v600, %v599
        %v604 = vunpack.c.l.s4 1966171168
        %v605 = vunpack.c.0.s8 %v604
        %v606 = vlaneseq
        %v607 = vshrl.u32 %v606, 7
        %v608 = vsub.s32 %v605, %v607
        %v609 = vrot.slane %v601, %v608
        %v611 = vunpack.c.l.s4 1966171168
        %v612 = vunpack.c.0.s8 %v611
        %v613 = vlaneseq
        %v614 = vshrl.u32 %v613, 7
        %v615 = vsub.s32 %v612, %v614
        %v616 = vrot.slane %v609, %v615
        %v618 = vadd.f32 %v595, %v616
        %s619 = scalar_lea.vmem %s317, 22
        %v620 = vld [vmem:[%s619] sm:$0x3]
        %v621 = vunpack.c.0.s8 %v620
        %v622 = vcvt.s32.f32 %v621
        %v623 = vstv %s335
        %v624 = vmul.f32 %v623, %v622
        %v627 = vunpack.c.l.s4 1966171168
        %v628 = vunpack.c.0.s8 %v627
        %v629 = vlaneseq
        %v630 = vshrl.u32 %v629, 7
        %v631 = vsub.s32 %v628, %v630
        %v632 = vrot.slane %v624, %v631
        %v634 = vunpack.c.l.s4 1966171168
        %v635 = vunpack.c.0.s8 %v634
        %v636 = vlaneseq
        %v637 = vshrl.u32 %v636, 7
        %v638 = vsub.s32 %v635, %v637
        %v639 = vrot.slane %v632, %v638
        %v641 = vadd.f32 %v618, %v639
        %v642 = vlaneseq
        %vm643 = vcmp.ge.s32.totalorder %v642, 0
        %vm644 = vcmp.lt.s32.totalorder %v642, 256
        %vm645 = vmand %vm643, %vm644
        %646 = vst.msk [vmem:[%s301] sm:$0x3] %vm645, %v641
        %s647 = sand.u32 %s162, 1
        %s648 = scalar_lea.sflag [#allocation3], %s647
        %s649 = sand.u32 %s162, 1
        %s650 = smul.addr %s649, 2
        %s651 = scalar_lea.vmem [#allocation8], %s650
        // Predicated region
        $region53: #{tpu_custom_call.1} parent=39 // pred_check
          %p652 = pneg %p172
        $region54: #{tpu_custom_call.1} parent=39 // pred_check_branch
          %654 = sbr.rel (%p652) target = $region56
        $region55: #{tpu_custom_call.1} parent=39 // pred_region
          %s656 = ssub.s32 32, 32
          %657 = vsyncadd %s648, %s656
          %s658 = smul.addr %s26, 2
          %s659 = smul.addr %s25, 2
          %s660 = sadd.s32 %s658, %s659
          %s661 = smul.addr %s660, 16
          %s662 = scalar_lea.hbm %s5, %s661
          %s664 = sshll.u32 %s651, 4
          %s665 = int_to_ptr.vmem [resolvable:$true] %s664
          %667 = dma.vmem_to_hbm [thread:$0]  %s665, 32, %s662, %s648
        $region56: #{tpu_custom_call.1} parent=39 // pred_fallthru
          _
      $region40: #{tpu_custom_call.1} parent=5 // pred_fallthru
        _
      %p668 = scmp.le.s32.totalorder 2, %s16
      // Predicated region
      $region57: #{tpu_custom_call.1} parent=5 // pred_check
        %p669 = pneg %p668
      $region58: #{tpu_custom_call.1} parent=5 // pred_check_branch
        %671 = sbr.rel (%p669) target = $region60
      $region59: #{tpu_custom_call.1} parent=5 // pred_region
        %s672 = ssub.s32 %s16, 2
        // Predicated region
        $region61: #{tpu_custom_call.1} parent=59 // pred_check
          %p673 = pneg %p178
        $region62: #{tpu_custom_call.1} parent=59 // pred_check_branch
          %675 = sbr.rel (%p673) target = $region64
        $region63: #{tpu_custom_call.1} parent=59 // pred_region
          %s676 = sand.u32 %s163, 1
          %s677 = scalar_lea.sflag [#allocation3], %s676
          %s678 = sand.u32 %s163, 1
          %s679 = smul.addr %s678, 2
          %s680 = scalar_lea.vmem [#allocation8], %s679
          %681 = dma.done %s677, 32
        $region64: #{tpu_custom_call.1} parent=59 // pred_fallthru
          _
      $region60: #{tpu_custom_call.1} parent=5 // pred_fallthru
        _
    $region6: #{tpu_custom_call.1} parent=1 // loop_footer
      %s20 = sadd.s32 1, %s16
    $region7: #{tpu_custom_call.1} parent=1 // loop_footer_branch
      %15 = sbr.rel target = $region3
    $region8: #{tpu_custom_call.1} parent=1 // loop_exit
      _
    %682 = vsyncpa [#allocation3], 1
    %s683 = scalar_lea.sflag [#allocation3], 1
    %684 = vsyncpa %s683, 1
    %685 = vsyncpa [#allocation4], 1
    %s686 = scalar_lea.sflag [#allocation4], 1
    %687 = vsyncpa %s686, 1
    %688 = vsyncpa [#allocation6], 1

</llo_original>
